<compile_context>
chip_gen: v5e
topology: v5e:2x2
jax: 0.10.0
libtpu: 0.0.40
codegen_flags: <defaults>
</compile_context>

<pallas_src>
from functools import partial

import jax
import jax.numpy as jnp
from jax.experimental import pallas as pl
from jax.experimental.pallas import tpu as pltpu

STATE_SPACE = 4      # CartPole-v1 observation_space.shape[0]
ACTION_SPACE = 2     # CartPole-v1 action_space.n
NUM_HIDDEN = 128
DROP_P = 0.8         # nn.Dropout(p=0.8): keep prob 0.2, kept values scaled by 1/0.2


def _policy_kernel(x_ref, u_ref, w1t_ref, wdiff_ref, o_ref, *, training: bool):
    # x_ref: (TB, 4) f32   u_ref: (TB, 128) f32 uniforms
    # w1t_ref: (4, 128) f32   wdiff_ref: (1, 128) f32 = w2[1] - w2[0]
    x = x_ref[...]
    w1t = w1t_ref[...]
    tb = x.shape[0]

    # ---- l1: Linear(4, 128, bias=False) ----
    if tb <= 256:
        # K=4 fills only 4 MXU rows; for small/latency-bound tiles use 4 VPU
        # broadcast FMAs over (TB, 128) instead of an MXU round-trip.
        h = x[:, 0:1] * w1t[0:1, :]
        for k in range(1, STATE_SPACE):
            h = h + x[:, k:k + 1] * w1t[k:k + 1, :]
    else:
        h = jnp.dot(x, w1t, preferred_element_type=jnp.float32)

    # ---- Dropout(p=0.8), training semantics ----
    if training:
        keep = u_ref[...] >= DROP_P                       # keep with prob 0.2
        h = jnp.where(keep, h * (1.0 / (1.0 - DROP_P)), 0.0)
    # TODO(synk): eval-mode callers pass training=False to bypass dropout (PyTorch .eval()).

    # ---- ReLU ----
    h = jnp.maximum(h, 0.0)

    # ---- l2 + Softmax(dim=-1) over 2 actions, rewritten exactly as a sigmoid ----
    # softmax([l0, l1]) = [1 - s, s] with s = sigmoid(l1 - l0), l1 - l0 = h @ (w2[1]-w2[0]).
    d = jnp.sum(h * wdiff_ref[...], axis=-1, keepdims=True)      # (TB, 1)
    p1 = 1.0 / (1.0 + jnp.exp(-d))                                # (TB, 1)  EUP exp

    # TODO(synk): for large-batch rollouts a lane-dense (B,) p1 output (stacked in the
    # wrapper) would avoid the 2-lane masked store; kept (B, 2) here for robustness.
    col = jax.lax.broadcasted_iota(jnp.int32, (tb, ACTION_SPACE), 1)
    o_ref[...] = jnp.where(col == 1, p1, 1.0 - p1)                # (TB, 2)


def prepare_params(w1, w2):
    """One-time parameter prep (hoisted out of the per-step forward).

    w1: (128, 4) PyTorch-style (out, in); w2: (2, 128).
    """
    w1t = jnp.transpose(w1)                                   # (4, 128)
    w_diff = (w2[1] - w2[0]).reshape(1, NUM_HIDDEN)           # (1, 128)
    return w1t, w_diff


def _choose_batch_tile(batch):
    # Largest tile <= 4096 rows that divides B (keeps double-buffered tiles well
    # inside v7x's 64 MiB VMEM); ragged/small batches fall back to a single tile.
    for tb in (4096, 2048, 1024, 512, 256, 128):
        if batch % tb == 0:
            return tb
    return batch


def policy_forward_masked(x, params, u, *, training=True):
    """x: (B, 4) f32; params = prepare_params(w1, w2); u: (B, 128) uniforms in [0, 1)."""
    w1t, w_diff = params
    batch = x.shape[0]
    tb = _choose_batch_tile(batch)
    grid = (batch // tb,)

    kernel = partial(_policy_kernel, training=training)
    return pl.pallas_call(
        kernel,
        out_shape=jax.ShapeDtypeStruct((batch, ACTION_SPACE), jnp.float32),
        grid=grid,
        in_specs=[
            pl.BlockSpec((tb, STATE_SPACE), lambda i: (i, 0)),          # x tile
            pl.BlockSpec((tb, NUM_HIDDEN), lambda i: (i, 0)),           # dropout uniforms tile
            pl.BlockSpec((STATE_SPACE, NUM_HIDDEN), lambda i: (0, 0)),  # w1^T (resident)
            pl.BlockSpec((1, NUM_HIDDEN), lambda i: (0, 0)),            # w2[1]-w2[0] (resident)
        ],
        out_specs=pl.BlockSpec((tb, ACTION_SPACE), lambda i: (i, 0)),
        compiler_params=pltpu.CompilerParams(
            dimension_semantics=("parallel",),
            vmem_limit_bytes=32 * 1024 * 1024,
        ),
    )(x, u, w1t, w_diff)


def policy_forward(x, params, dropout_key, *, training=True):
    # TODO(synk): dropout mask distribution matches torch.nn.Dropout, not torch's RNG
    # bit stream; randomness is drawn with jax.random (portable across TPU + interpret).
    u = jax.random.uniform(dropout_key, (x.shape[0], NUM_HIDDEN), dtype=jnp.float32)
    return policy_forward_masked(x, params, u, training=training)


def _policy_ref(x, w1, w2, u, training=True):
    """Pure-JAX reference of the PyTorch forward, using the same dropout uniforms."""
    h = x @ w1.T
    if training:
        h = jnp.where(u >= DROP_P, h / (1.0 - DROP_P), 0.0)
    h = jnp.maximum(h, 0.0)
    logits = h @ w2.T
    return jax.nn.softmax(logits, axis=-1)


if __name__ == "__main__":
    key = jax.random.PRNGKey(0)
    kx, k1, k2, kd = jax.random.split(key, 4)

    B = 8
    x = jax.random.normal(kx, (B, STATE_SPACE), dtype=jnp.float32)

    # PyTorch Linear default init: U(-1/sqrt(fan_in), 1/sqrt(fan_in))
    b1 = 1.0 / (STATE_SPACE ** 0.5)
    w1 = jax.random.uniform(k1, (NUM_HIDDEN, STATE_SPACE), jnp.float32, -b1, b1)
    b2 = 1.0 / (NUM_HIDDEN ** 0.5)
    w2 = jax.random.uniform(k2, (ACTION_SPACE, NUM_HIDDEN), jnp.float32, -b2, b2)

    params = prepare_params(w1, w2)

    # Use an explicit uniform tensor so the kernel can be checked against the reference.
    u = jax.random.uniform(kd, (B, NUM_HIDDEN), dtype=jnp.float32)

    out = policy_forward_masked(x, params, u, training=True)
    out = jax.block_until_ready(out)
    ref = _policy_ref(x, w1, w2, u, training=True)

    assert out.shape == (B, ACTION_SPACE)
    assert bool(jnp.all(jnp.isfinite(out)))
    assert bool(jnp.allclose(jnp.sum(out, axis=-1), 1.0, atol=1e-5))
    assert bool(jnp.allclose(out, ref, atol=1e-4, rtol=1e-4))

    print("KERNEL_OK")
</pallas_src>

<mosaic_0001>
module attributes {stable_mosaic.version = 11 : i64} {
  func.func @_policy_kernel(%arg0: i32, %arg1: memref<8x4xf32, #tpu.memory_space<vmem>>, %arg2: memref<8x128xf32, #tpu.memory_space<vmem>>, %arg3: memref<4x128xf32, #tpu.memory_space<vmem>>, %arg4: memref<1x128xf32, #tpu.memory_space<vmem>>, %arg5: memref<8x2xf32, #tpu.memory_space<vmem>>) attributes {dimension_semantics = [#tpu.dimension_semantics<parallel>], iteration_bounds = array<i64: 1>, scalar_prefetch = 0 : i64, scratch_operands = 0 : i64, tpu.core_type = #tpu.core_type<tc>, window_params = [{transform_indices = @transform_0, window_bounds = array<i64: 8, 4>}, {transform_indices = @transform_1, window_bounds = array<i64: 8, 128>}, {pipeline_mode = #tpu.pipeline_mode<synchronous>, transform_indices = @transform_2, window_bounds = array<i64: 4, 128>}, {pipeline_mode = #tpu.pipeline_mode<synchronous>, transform_indices = @transform_3, window_bounds = array<i64: 1, 128>}, {transform_indices = @transform_4, window_bounds = array<i64: 8, 2>}]} {
    %c0 = arith.constant 0 : index
    %c0_0 = arith.constant 0 : index
    %0 = vector.load %arg1[%c0, %c0_0] : memref<8x4xf32, #tpu.memory_space<vmem>>, vector<8x4xf32>
    %c0_1 = arith.constant 0 : index
    %c0_2 = arith.constant 0 : index
    %1 = vector.load %arg3[%c0_1, %c0_2] : memref<4x128xf32, #tpu.memory_space<vmem>>, vector<4x128xf32>
    %2 = vector.extract_strided_slice %0 {offsets = [0, 0], sizes = [8, 1], strides = [1, 1]} : vector<8x4xf32> to vector<8x1xf32>
    %3 = vector.extract_strided_slice %1 {offsets = [0, 0], sizes = [1, 128], strides = [1, 1]} : vector<4x128xf32> to vector<1x128xf32>
    %4 = vector.broadcast %2 : vector<8x1xf32> to vector<8x128xf32>
    %5 = vector.broadcast %3 : vector<1x128xf32> to vector<8x128xf32>
    %6 = arith.mulf %4, %5 : vector<8x128xf32>
    %7 = vector.extract_strided_slice %0 {offsets = [0, 1], sizes = [8, 1], strides = [1, 1]} : vector<8x4xf32> to vector<8x1xf32>
    %8 = vector.extract_strided_slice %1 {offsets = [1, 0], sizes = [1, 128], strides = [1, 1]} : vector<4x128xf32> to vector<1x128xf32>
    %9 = vector.broadcast %7 : vector<8x1xf32> to vector<8x128xf32>
    %10 = vector.broadcast %8 : vector<1x128xf32> to vector<8x128xf32>
    %11 = arith.mulf %9, %10 : vector<8x128xf32>
    %12 = arith.addf %6, %11 : vector<8x128xf32>
    %13 = vector.extract_strided_slice %0 {offsets = [0, 2], sizes = [8, 1], strides = [1, 1]} : vector<8x4xf32> to vector<8x1xf32>
    %14 = vector.extract_strided_slice %1 {offsets = [2, 0], sizes = [1, 128], strides = [1, 1]} : vector<4x128xf32> to vector<1x128xf32>
    %15 = vector.broadcast %13 : vector<8x1xf32> to vector<8x128xf32>
    %16 = vector.broadcast %14 : vector<1x128xf32> to vector<8x128xf32>
    %17 = arith.mulf %15, %16 : vector<8x128xf32>
    %18 = arith.addf %12, %17 : vector<8x128xf32>
    %19 = vector.extract_strided_slice %0 {offsets = [0, 3], sizes = [8, 1], strides = [1, 1]} : vector<8x4xf32> to vector<8x1xf32>
    %20 = vector.extract_strided_slice %1 {offsets = [3, 0], sizes = [1, 128], strides = [1, 1]} : vector<4x128xf32> to vector<1x128xf32>
    %21 = vector.broadcast %19 : vector<8x1xf32> to vector<8x128xf32>
    %22 = vector.broadcast %20 : vector<1x128xf32> to vector<8x128xf32>
    %23 = arith.mulf %21, %22 : vector<8x128xf32>
    %24 = arith.addf %18, %23 : vector<8x128xf32>
    %c0_3 = arith.constant 0 : index
    %c0_4 = arith.constant 0 : index
    %25 = vector.load %arg2[%c0_3, %c0_4] : memref<8x128xf32, #tpu.memory_space<vmem>>, vector<8x128xf32>
    %cst = arith.constant 8.000000e-01 : f32
    %26 = vector.broadcast %cst : f32 to vector<8x128xf32>
    %27 = arith.cmpf oge, %25, %26 : vector<8x128xf32>
    %cst_5 = arith.constant 5.000000e+00 : f32
    %28 = vector.broadcast %cst_5 : f32 to vector<8x128xf32>
    %29 = arith.mulf %24, %28 : vector<8x128xf32>
    %cst_6 = arith.constant 0.000000e+00 : f32
    %30 = vector.broadcast %cst_6 : f32 to vector<8x128xf32>
    %31 = arith.select %27, %29, %30 : vector<8x128xi1>, vector<8x128xf32>
    %cst_7 = arith.constant 0.000000e+00 : f32
    %32 = vector.broadcast %cst_7 : f32 to vector<8x128xf32>
    %33 = arith.maximumf %31, %32 : vector<8x128xf32>
    %c0_8 = arith.constant 0 : index
    %c0_9 = arith.constant 0 : index
    %34 = vector.load %arg4[%c0_8, %c0_9] : memref<1x128xf32, #tpu.memory_space<vmem>>, vector<1x128xf32>
    %35 = vector.broadcast %34 : vector<1x128xf32> to vector<8x128xf32>
    %36 = arith.mulf %33, %35 : vector<8x128xf32>
    %cst_10 = arith.constant dense<0.000000e+00> : vector<8xf32>
    %37 = vector.multi_reduction <add>, %36, %cst_10 [1] : vector<8x128xf32> to vector<8xf32>
    %38 = vector.shape_cast %37 : vector<8xf32> to vector<8x1xf32>
    %cst_11 = arith.constant 0.000000e+00 : f32
    %39 = vector.broadcast %cst_11 : f32 to vector<8x1xf32>
    %40 = arith.subf %39, %38 : vector<8x1xf32>
    %41 = math.exp %40 : vector<8x1xf32>
    %cst_12 = arith.constant 1.000000e+00 : f32
    %42 = vector.broadcast %cst_12 : f32 to vector<8x1xf32>
    %43 = arith.addf %42, %41 : vector<8x1xf32>
    %cst_13 = arith.constant 1.000000e+00 : f32
    %44 = vector.broadcast %cst_13 : f32 to vector<8x1xf32>
    %45 = arith.divf %44, %43 : vector<8x1xf32>
    %46 = tpu.iota {dimensions = array<i32: 1>} : vector<8x2xi32>
    %c1_i32 = arith.constant 1 : i32
    %47 = vector.broadcast %c1_i32 : i32 to vector<8x2xi32>
    %48 = arith.cmpi eq, %46, %47 : vector<8x2xi32>
    %cst_14 = arith.constant 1.000000e+00 : f32
    %49 = vector.broadcast %cst_14 : f32 to vector<8x1xf32>
    %50 = arith.subf %49, %45 : vector<8x1xf32>
    %51 = vector.shape_cast %45 : vector<8x1xf32> to vector<8x1xf32>
    %52 = vector.broadcast %51 : vector<8x1xf32> to vector<8x2xf32>
    %53 = vector.shape_cast %50 : vector<8x1xf32> to vector<8x1xf32>
    %54 = vector.broadcast %53 : vector<8x1xf32> to vector<8x2xf32>
    %55 = arith.select %48, %52, %54 : vector<8x2xi1>, vector<8x2xf32>
    %c0_15 = arith.constant 0 : index
    %c0_16 = arith.constant 0 : index
    %56 = vector.load %arg5[%c0_15, %c0_16] : memref<8x2xf32, #tpu.memory_space<vmem>>, vector<8x2xf32>
    tpu.vector_store %arg5[%c0_15, %c0_16], %55 {strides = array<i32>} : memref<8x2xf32, #tpu.memory_space<vmem>>, vector<8x2xf32>,
    return
  }
  func.func @transform_0(%arg0: i32) -> (i32, i32) {
    %c0_i32 = arith.constant 0 : i32
    %c0_i32_0 = arith.constant 0 : i32
    return %arg0, %c0_i32 : i32, i32
  }
  func.func @transform_1(%arg0: i32) -> (i32, i32) {
    %c0_i32 = arith.constant 0 : i32
    %c0_i32_0 = arith.constant 0 : i32
    return %arg0, %c0_i32 : i32, i32
  }
  func.func @transform_2(%arg0: i32) -> (i32, i32) {
    %c0_i32 = arith.constant 0 : i32
    %c0_i32_0 = arith.constant 0 : i32
    %c0_i32_1 = arith.constant 0 : i32
    return %c0_i32, %c0_i32_0 : i32, i32
  }
  func.func @transform_3(%arg0: i32) -> (i32, i32) {
    %c0_i32 = arith.constant 0 : i32
    %c0_i32_0 = arith.constant 0 : i32
    %c0_i32_1 = arith.constant 0 : i32
    return %c0_i32, %c0_i32_0 : i32, i32
  }
  func.func @transform_4(%arg0: i32) -> (i32, i32) {
    %c0_i32 = arith.constant 0 : i32
    %c0_i32_0 = arith.constant 0 : i32
    return %arg0, %c0_i32 : i32, i32
  }
}

</mosaic_0001>

<llo_original>
// kernel: tpu_custom_call.1
$region0: #{tpu_custom_call.1}
  #allocation0 [shape = 'u32[]', space=smem, size = 0x4, offset = 0x4, fixed_abs, tag = 'smem constant byte address 0x4 - core index']
  #allocation1 [shape = 'u32[72,128]{1,0:T(1,128)}', space=vmem, size = 0x9000, scoped, tag = 'internal scratch']
  %s0 = inlined_call_operand.vmem [shape: f32[8,4], index: 0, kind: input, shape index: {}]
  %s1 = inlined_call_operand.vmem [shape: f32[8,128], index: 1, kind: input, shape index: {}]
  %s2 = inlined_call_operand.vmem [shape: f32[4,128], index: 2, kind: input, shape index: {}]
  %s3 = inlined_call_operand.vmem [shape: f32[1,128], index: 3, kind: input, shape index: {}]
  %s4 = inlined_call_operand.vmem [shape: f32[8,2], index: 4, kind: output, shape index: {}]
  %s5 = sld [smem:[#allocation0]]
  $region26: #{tpu_custom_call.1} parent=0
    _
  %s7 = ssub.s32 1, %s5
  %s8 = scalar_select 0, %s7, %s5
  // Predicated region
  $region2: #{tpu_custom_call.1} parent=0 // pred_check
    _
  $region3: #{tpu_custom_call.1} parent=0 // pred_check_branch
    %10 = sbr.rel (0) target = $region5
  $region4: #{tpu_custom_call.1} parent=0 // pred_region
    _
  $region5: #{tpu_custom_call.1} parent=0 // pred_fallthru
    _
  // Predicated region
  $region6: #{tpu_custom_call.1} parent=0 // pred_check
    _
  $region7: #{tpu_custom_call.1} parent=0 // pred_check_branch
    %12 = sbr.rel (0) target = $region9
  $region8: #{tpu_custom_call.1} parent=0 // pred_region
    _
  $region9: #{tpu_custom_call.1} parent=0 // pred_fallthru
    _
  // Predicated region
  $region10: #{tpu_custom_call.1} parent=0 // pred_check
    _
  $region11: #{tpu_custom_call.1} parent=0 // pred_check_branch
    %14 = sbr.rel (0) target = $region13
  $region12: #{tpu_custom_call.1} parent=0 // pred_region
    _
  $region13: #{tpu_custom_call.1} parent=0 // pred_fallthru
    _
  // Predicated region
  $region14: #{tpu_custom_call.1} parent=0 // pred_check
    _
  $region15: #{tpu_custom_call.1} parent=0 // pred_check_branch
    %16 = sbr.rel (0) target = $region17
  $region16: #{tpu_custom_call.1} parent=0 // pred_region
    _
  $region17: #{tpu_custom_call.1} parent=0 // pred_fallthru
    _
  %v17 = vld [vmem:[%s0] sm:$0xff]
  %v18 = vld [vmem:[%s2] sm:$0xf]
  %20 = vset.pattern.permute.xlu0 0
  %21 = vperm.xlu0 %20, %v17
  %v22 = vpop.permute.xlu0 %21
  %v24 = vperm.slane %v18, 0
  %v25 = vmul.f32 %v22, %v24
  %26 = vset.pattern.permute.xlu0 1
  %27 = vperm.xlu0 %26, %v17
  %v28 = vpop.permute.xlu0 %27
  %v30 = vperm.slane %v18, 1
  %v31 = vmul.f32 %v28, %v30
  %v32 = vadd.f32 %v25, %v31
  %33 = vset.pattern.permute.xlu0 2
  %34 = vperm.xlu0 %33, %v17
  %v35 = vpop.permute.xlu0 %34
  %v37 = vperm.slane %v18, 2
  %v38 = vmul.f32 %v35, %v37
  %v39 = vadd.f32 %v32, %v38
  %40 = vset.pattern.permute.xlu0 3
  %41 = vperm.xlu0 %40, %v17
  %v42 = vpop.permute.xlu0 %41
  %v44 = vperm.slane %v18, 3
  %v45 = vmul.f32 %v42, %v44
  %v46 = vadd.f32 %v39, %v45
  %v47 = vld [vmem:[%s1] sm:$0xff]
  %vm48 = vcmp.ge.f32.partialorder %v47, 0.8
  %v49 = vmul.f32 %v46, 5.0
  %v50 = vsel %vm48, %v49, 0.0
  %v51 = vmax.f32 %v50, 0.0
  %v52 = vld [vmem:[%s3] sm:$0x1]
  %v54 = vperm.slane %v52, 0
  %v56 = vmul.f32 %v51, %v54
  %57 = vadd.xlane.f32.xlu0 %v56
  %v58 = vpop.xlane.xlu0 %57
  %v59 = vsub.f32 0.0, %v58
  %v60 = vmul.f32 %v59, 1.442695
  %v61 = vpow.pop %v60
  %v62 = vadd.f32 %v61, 1.0
  %v63 = vrcp.pop %v62
  %v64 = vmul.f32 %v62, %v63
  %v65 = vsub.f32 1.0, %v64
  %v66 = vmul.f32 %v63, %v65
  %v67 = vadd.f32 %v63, %v66
  %vm68 = vweird.f32 %v62
  %vm69 = vweird.f32 %v63
  %vm70 = vmor %vm68, %vm69
  %v71 = vsel %vm70, %v63, %v67
  %v72 = vand.u32 2147483647, %v62
  %vm73 = vcmp.eq.f32.partialorder %v72, 8.507059e+37
  %v74 = vand.u32 %v62, 2147483648
  %v75 = vor.u32 1.1754944e-38, %v74
  %v76 = vsel %vm73, %v75, %v71
  %v77 = vmul.f32 1.0, %v76
  %v78 = vlaneseq
  %v79 = vand.u32 %v78, 127
  %vm80 = vcmp.eq.s32.totalorder %v79, 1
  %v81 = vsub.f32 1.0, %v77
  %v82 = vsel %vm80, %v77, %v81
  %vm83 = vcmask 15360
  %84 = vst.msk [vmem:[%s4] sm:$0xff] %vm83, %v82
  // Predicated region
  $region18: #{tpu_custom_call.1} parent=0 // pred_check
    _
  $region19: #{tpu_custom_call.1} parent=0 // pred_check_branch
    %86 = sbr.rel (0) target = $region21
  $region20: #{tpu_custom_call.1} parent=0 // pred_region
    _
  $region21: #{tpu_custom_call.1} parent=0 // pred_fallthru
    _
  // Predicated region
  $region22: #{tpu_custom_call.1} parent=0 // pred_check
    _
  $region23: #{tpu_custom_call.1} parent=0 // pred_check_branch
    %88 = sbr.rel (0) target = $region25
  $region24: #{tpu_custom_call.1} parent=0 // pred_region
    _
  $region25: #{tpu_custom_call.1} parent=0 // pred_fallthru
    _

</llo_original>
